<compile_context>
chip_gen: v6e
topology: v6e:2x2x1
jax: 0.10.0
libtpu: 0.0.40
codegen_flags: <defaults>
</compile_context>

<pallas_src>
import functools

import jax
import jax.numpy as jnp
from jax.experimental import pallas as pl
from jax.experimental.pallas import tpu as pltpu

_LANE = 128
_SUBLANE = 8


def _round_up(x, m):
    return ((x + m - 1) // m) * m


def lr_kernel(x_ref, w_ref, b_ref, o_ref, acc_ref, *, d_in, tk):
    # x_ref: (TM, TK) VMEM (streamed)    w_ref: (1, TK) VMEM (tiny strip)
    # b_ref: (1, 1) SMEM scalar          o_ref: (1, TM) VMEM (lane-dense)
    # acc_ref: (1, TM) f32 VMEM scratch accumulating over the K grid axis.
    k = pl.program_id(1)

    @pl.when(k == 0)
    def _():
        acc_ref[...] = jnp.zeros_like(acc_ref)

    x = x_ref[...]
    w = w_ref[...]
    if d_in % tk:
        # Trailing K tile reads past d_in: zero the out-of-range columns of both
        # operands so unspecified (possibly NaN/Inf) data never reaches the
        # accumulator.  Static branch: only emitted when a K tail exists.
        col = k * tk + jax.lax.broadcasted_iota(jnp.int32, (1, tk), 1)
        valid = col < d_in
        x = jnp.where(valid, x, 0.0)
        w = jnp.where(valid, w, 0.0)

    acc_ref[...] += jax.lax.dot_general(
        w, x,
        dimension_numbers=(((1,), (1,)), ((), ())),   # contract the d_in axis
        preferred_element_type=jnp.float32,
        precision=jax.lax.Precision.HIGHEST,
    )                                                 # (1, TM)

    @pl.when(k == pl.num_programs(1) - 1)
    def _():
        z = acc_ref[...] + b_ref[0, 0]
        o_ref[...] = jax.nn.sigmoid(z).astype(o_ref.dtype)


def _choose_tiles(batch, d_in, itemsize,
                  x_tile_target_bytes=4 * 1024 * 1024,
                  vmem_budget_bytes=12 * 1024 * 1024):
    """Pick (TM, TK) for streaming x.

    - Stream ~x_tile_target_bytes of x per grid step (amortizes the ~0.35 us
      per-step pipeline overhead at 0.8-3.2 TB/s HBM).
    - Keep the full pipeline footprint (2x lane-padded x tile, 2x weight strip,
      2x (1,TM) output slab, f32 accumulator) under vmem_budget_bytes, which fits
      the smallest default scoped-VMEM limit (v5e: 16 MiB) without raising
      vmem_limit_bytes and is far below v7x's 64 MiB physical VMEM.
    - K-split only when a full lane-padded row exceeds 8 KiB (f32 d_in > 2048),
      so TM stays large for any d_in.
    """
    full_row_bytes = _round_up(max(d_in, 1), _LANE) * itemsize
    if full_row_bytes <= 8192:
        tk = d_in                      # whole reduction in one step
    else:
        tk = 8192 // itemsize          # 8 KiB-wide K strips (multiple of 128)
    row_bytes = _round_up(max(tk, 1), _LANE) * itemsize

    # M tile: multiple of 128 (lane-dense, unmasked output stores).
    w_bytes = 2 * _SUBLANE * row_bytes                 # double-buffered (1,TK) strip
    per_row_bytes = 2 * row_bytes + 3 * _SUBLANE * 4   # 2x x row + (2x out + acc) slabs
    tm_cap = max(_LANE, (vmem_budget_bytes - w_bytes) // per_row_bytes)
    tm = max(x_tile_target_bytes // row_bytes, _LANE)
    tm = min(tm, tm_cap)
    tm = max(_LANE, (tm // _LANE) * _LANE)

    if batch <= tm:
        tm = batch   # single batch tile: block spans the full dim, no padding needed
    return tm, tk


def lr_forward(x, weight, bias, *, tile_m=None, tile_k=None):
    """x: (B, d_in) f32; weight: (1, d_in) f32 (PyTorch layout); bias: (1,) f32.
    Returns sigmoid(x @ weight.T + bias) with shape (B, 1)."""
    B, d_in = x.shape
    tm, tk = _choose_tiles(B, d_in, x.dtype.itemsize)
    if tile_m is not None:
        tm = tile_m
    if tile_k is not None:
        tk = tile_k
    num_m = pl.cdiv(B, tm)   # partial trailing batch block handled by Pallas
    num_k = pl.cdiv(d_in, tk)

    out = pl.pallas_call(
        functools.partial(lr_kernel, d_in=d_in, tk=tk),
        out_shape=jax.ShapeDtypeStruct((1, B), x.dtype),
        grid=(num_m, num_k),
        in_specs=[
            pl.BlockSpec((tm, tk), lambda i, k: (i, k)),           # streamed x tiles
            pl.BlockSpec((1, tk), lambda i, k: (0, k)),            # weight strip (tiny)
            pl.BlockSpec(memory_space=pltpu.MemorySpace.SMEM),     # scalar bias in SMEM
        ],
        out_specs=pl.BlockSpec((1, tm), lambda i, k: (0, i)),      # lane-dense output slab
        scratch_shapes=[pltpu.VMEM((1, tm), jnp.float32)],         # K-axis accumulator
        compiler_params=pltpu.CompilerParams(
            # Batch axis shards across both TensorCores on v7x; K is the reduction
            # axis and therefore last + "arbitrary".
            dimension_semantics=("parallel", "arbitrary"),
        ),
    )(x, weight, bias.reshape(1, 1))

    # (1, B) lane-dense slab -> (B, 1) column, matching nn.Linear(d_in, 1).
    return out.reshape(B, 1)


if __name__ == "__main__":
    key = jax.random.PRNGKey(0)
    kx, kw, kb, kx2 = jax.random.split(key, 4)

    # Small shapes consistent with the module: batch=8, d_in=32.
    d_in, B = 32, 8
    bound = 1.0 / (d_in ** 0.5)   # mimic nn.Linear's U(-1/sqrt(d_in), 1/sqrt(d_in))
    weight = jax.random.uniform(kw, (1, d_in), jnp.float32, -bound, bound)
    bias = jax.random.uniform(kb, (1,), jnp.float32, -bound, bound)
    x = jax.random.normal(kx, (B, d_in), jnp.float32)

    out = jax.block_until_ready(lr_forward(x, weight, bias))
    ref = jax.nn.sigmoid(
        jnp.dot(x, weight.T, precision=jax.lax.Precision.HIGHEST) + bias)
    assert out.shape == (B, 1)
    assert jnp.allclose(out, ref, atol=1e-5, rtol=1e-5)

    # Exercise the multi-tile grid, the partial trailing batch block, and the
    # masked K (d_in) tail using small tile overrides (B and d_in not multiples
    # of the 128-sized tiles).
    d2, B2 = 200, 200
    bound2 = 1.0 / (d2 ** 0.5)
    w2 = jax.random.uniform(kw, (1, d2), jnp.float32, -bound2, bound2)
    b2 = jax.random.uniform(kb, (1,), jnp.float32, -bound2, bound2)
    x2 = jax.random.normal(kx2, (B2, d2), jnp.float32)
    out2 = jax.block_until_ready(lr_forward(x2, w2, b2, tile_m=128, tile_k=128))
    ref2 = jax.nn.sigmoid(
        jnp.dot(x2, w2.T, precision=jax.lax.Precision.HIGHEST) + b2)
    assert out2.shape == (B2, 1)
    assert jnp.allclose(out2, ref2, atol=1e-5, rtol=1e-5)

    print("KERNEL_OK")
</pallas_src>

<mosaic_0001>
module attributes {stable_mosaic.version = 11 : i64} {
  func.func @lr_kernel(%arg0: i32, %arg1: i32, %arg2: memref<8x32xf32, #tpu.memory_space<vmem>>, %arg3: memref<1x32xf32, #tpu.memory_space<vmem>>, %arg4: memref<1x1xf32, #tpu.memory_space<smem>>, %arg5: memref<1x8xf32, #tpu.memory_space<vmem>>, %arg6: memref<1x8xf32, #tpu.memory_space<vmem>>) attributes {dimension_semantics = [#tpu.dimension_semantics<parallel>, #tpu.dimension_semantics<arbitrary>], iteration_bounds = array<i64: 1, 1>, scalar_prefetch = 0 : i64, scratch_operands = 1 : i64, tpu.core_type = #tpu.core_type<tc>, window_params = [{transform_indices = @transform_0, window_bounds = array<i64: 8, 32>}, {transform_indices = @transform_1, window_bounds = array<i64: 1, 32>}, {transform_indices = @transform_2, window_bounds = array<i64: 1, 1>}, {transform_indices = @transform_3, window_bounds = array<i64: 1, 8>}]} {
    %c0_i32 = arith.constant 0 : i32
    %0 = arith.cmpi eq, %arg1, %c0_i32 : i32
    %1 = arith.extui %0 : i1 to i32
    %c0_i32_0 = arith.constant 0 : i32
    %2 = arith.cmpi ne, %1, %c0_i32_0 : i32
    scf.if %2 {
      %cst_10 = arith.constant 0.000000e+00 : f32
      %12 = vector.broadcast %cst_10 : f32 to vector<1x8xf32>
      %c0_11 = arith.constant 0 : index
      %c0_12 = arith.constant 0 : index
      %13 = vector.load %arg6[%c0_11, %c0_12] : memref<1x8xf32, #tpu.memory_space<vmem>>, vector<1x8xf32>
      tpu.vector_store %arg6[%c0_11, %c0_12], %12 {strides = array<i32>} : memref<1x8xf32, #tpu.memory_space<vmem>>, vector<1x8xf32>,
    } else {
    }
    %c0 = arith.constant 0 : index
    %c0_1 = arith.constant 0 : index
    %3 = vector.load %arg2[%c0, %c0_1] : memref<8x32xf32, #tpu.memory_space<vmem>>, vector<8x32xf32>
    %c0_2 = arith.constant 0 : index
    %c0_3 = arith.constant 0 : index
    %4 = vector.load %arg3[%c0_2, %c0_3] : memref<1x32xf32, #tpu.memory_space<vmem>>, vector<1x32xf32>
    %c0_4 = arith.constant 0 : index
    %c0_5 = arith.constant 0 : index
    %5 = vector.load %arg6[%c0_4, %c0_5] : memref<1x8xf32, #tpu.memory_space<vmem>>, vector<1x8xf32>
    %cst = arith.constant dense<0.000000e+00> : vector<1x8xf32>
    %6 = tpu.matmul %4, %3, %cst {dimension_numbers = #tpu.dot_dimension_numbers<[1], [1], [0], [0], [0, 0, 1, 0], [], []>, precision = #tpu.contract_precision<fp32>} : vector<1x32xf32>, vector<8x32xf32>, vector<1x8xf32> -> vector<1x8xf32>
    %7 = arith.addf %5, %6 : vector<1x8xf32>
    %c0_6 = arith.constant 0 : index
    %c0_7 = arith.constant 0 : index
    %8 = vector.load %arg6[%c0_6, %c0_7] : memref<1x8xf32, #tpu.memory_space<vmem>>, vector<1x8xf32>
    tpu.vector_store %arg6[%c0_6, %c0_7], %7 {strides = array<i32>} : memref<1x8xf32, #tpu.memory_space<vmem>>, vector<1x8xf32>,
    %c0_i32_8 = arith.constant 0 : i32
    %9 = arith.cmpi eq, %arg1, %c0_i32_8 : i32
    %10 = arith.extui %9 : i1 to i32
    %c0_i32_9 = arith.constant 0 : i32
    %11 = arith.cmpi ne, %10, %c0_i32_9 : i32
    scf.if %11 {
      %c0_10 = arith.constant 0 : index
      %c0_11 = arith.constant 0 : index
      %12 = vector.load %arg6[%c0_10, %c0_11] : memref<1x8xf32, #tpu.memory_space<vmem>>, vector<1x8xf32>
      %c0_12 = arith.constant 0 : index
      %c0_13 = arith.constant 0 : index
      %13 = memref.load %arg4[%c0_12, %c0_13] : memref<1x1xf32, #tpu.memory_space<smem>>
      %14 = vector.broadcast %13 : f32 to vector<1x8xf32>
      %15 = arith.addf %12, %14 : vector<1x8xf32>
      %16 = arith.negf %15 : vector<1x8xf32>
      %17 = math.exp %16 : vector<1x8xf32>
      %cst_14 = arith.constant 1.000000e+00 : f32
      %18 = vector.broadcast %cst_14 : f32 to vector<1x8xf32>
      %19 = arith.addf %18, %17 : vector<1x8xf32>
      %20 = arith.divf %18, %19 : vector<1x8xf32>
      %c0_15 = arith.constant 0 : index
      %c0_16 = arith.constant 0 : index
      %21 = vector.load %arg5[%c0_15, %c0_16] : memref<1x8xf32, #tpu.memory_space<vmem>>, vector<1x8xf32>
      tpu.vector_store %arg5[%c0_15, %c0_16], %20 {strides = array<i32>} : memref<1x8xf32, #tpu.memory_space<vmem>>, vector<1x8xf32>,
    } else {
    }
    return
  }
  func.func @transform_0(%arg0: i32, %arg1: i32) -> (i32, i32) {
    %c0_i32 = arith.constant 0 : i32
    return %arg0, %arg1 : i32, i32
  }
  func.func @transform_1(%arg0: i32, %arg1: i32) -> (i32, i32) {
    %c0_i32 = arith.constant 0 : i32
    %c0_i32_0 = arith.constant 0 : i32
    return %c0_i32, %arg1 : i32, i32
  }
  func.func @transform_2(%arg0: i32, %arg1: i32) -> (i32, i32) {
    %c0_i32 = arith.constant 0 : i32
    %c0_i32_0 = arith.constant 0 : i32
    %c0_i32_1 = arith.constant 0 : i32
    return %c0_i32, %c0_i32_0 : i32, i32
  }
  func.func @transform_3(%arg0: i32, %arg1: i32) -> (i32, i32) {
    %c0_i32 = arith.constant 0 : i32
    %c0_i32_0 = arith.constant 0 : i32
    return %c0_i32, %arg0 : i32, i32
  }
}

</mosaic_0001>

<llo_original>
// kernel: tpu_custom_call.1
$region0: #{tpu_custom_call.1}
  #allocation0 [shape = 'u32[]', space=smem, size = 0x4, offset = 0x4, fixed_abs, tag = 'smem constant byte address 0x4 - core index']
  #allocation1 [shape = 'u32[144,128]{1,0:T(1,128)}', space=vmem, size = 0x12000, scoped, tag = 'internal scratch']
  #allocation2 [shape = 'f32[1,8]{1,0:T(1,128)}', space=vmem, size = 0x200, scoped, tag = 'scratch operand']
  #allocation3 [shape = 'f32[1,1]{1,0:T(1,128)S(6)}', space=smem, size = 0x200, scoped, tag = 'scoped memory for tpu_custom_call.1']
  %s0 = inlined_call_operand.hbm [shape: f32[8,32], index: 0, kind: input, shape index: {}]
  %s1 = inlined_call_operand.vmem [shape: f32[1,32], index: 1, kind: input, shape index: {}]
  %s2 = inlined_call_operand.<no memory space> [shape: f32[1,1], index: 2, kind: input, shape index: {}]
  %s3 = inlined_call_operand.hbm [shape: f32[1,8], index: 3, kind: output, shape index: {}]
  %s4 = sld [smem:[#allocation0]]
  $region34: #{tpu_custom_call.1} parent=0
    _
  %s6 = ssub.s32 1, %s4
  %s7 = scalar_select 0, %s6, %s4
  %8 = sst [smem:[#allocation3]] %s2
  $region1: #{tpu_custom_call.1} parent=0
    #allocation4 [shape = 'u8[4096]{0}', space=vmem, size = 0x1000, scoped, tag = 'input window, operand 0, single buffered']
    #allocation5 [shape = 's32[1]{0}', space=sflag, size = 0x4, scoped, tag = 'scoped memory for tpu_custom_call.1']
    #allocation6 [shape = 's32[1]{0}', space=sflag, size = 0x4, scoped, tag = 'scoped memory for tpu_custom_call.1']
    #allocation7 [shape = 'u8[512]{0}', space=vmem, size = 0x400, scoped, tag = 'output window, operand 0, single buffered']
    %9 = vsyncpa [#allocation5], 0
    %10 = vsyncpa [#allocation6], 0
    // Predicated region
    $region2: #{tpu_custom_call.1} parent=1 // pred_check
      _
    $region3: #{tpu_custom_call.1} parent=1 // pred_check_branch
      %12 = sbr.rel (0) target = $region5
    $region4: #{tpu_custom_call.1} parent=1 // pred_region
      %s14 = ssub.s32 128, 128
      %15 = vsyncadd [#allocation5], %s14
      %s17 = sshll.u32 [#allocation4], 4
      %s18 = int_to_ptr.vmem [resolvable:$true] %s17
      %20 = dma.hbm_to_vmem [thread:$0]  %s0, 128, %s18, [#allocation5]
    $region5: #{tpu_custom_call.1} parent=1 // pred_fallthru
      _
    // Predicated region
    $region6: #{tpu_custom_call.1} parent=1 // pred_check
      _
    $region7: #{tpu_custom_call.1} parent=1 // pred_check_branch
      %22 = sbr.rel (0) target = $region9
    $region8: #{tpu_custom_call.1} parent=1 // pred_region
      _
    $region9: #{tpu_custom_call.1} parent=1 // pred_fallthru
      _
    // Predicated region
    $region10: #{tpu_custom_call.1} parent=1 // pred_check
      _
    $region11: #{tpu_custom_call.1} parent=1 // pred_check_branch
      %24 = sbr.rel (0) target = $region13
    $region12: #{tpu_custom_call.1} parent=1 // pred_region
      _
    $region13: #{tpu_custom_call.1} parent=1 // pred_fallthru
      _
    // Predicated region
    $region14: #{tpu_custom_call.1} parent=1 // pred_check
      _
    $region15: #{tpu_custom_call.1} parent=1 // pred_check_branch
      %26 = sbr.rel (0) target = $region17
    $region16: #{tpu_custom_call.1} parent=1 // pred_region
      %27 = dma.done [#allocation5], 128
    $region17: #{tpu_custom_call.1} parent=1 // pred_fallthru
      _
    %p28 = scmp.eq.s32.totalorder 0, 0
    // Predicated region
    $region18: #{tpu_custom_call.1} parent=1 // pred_check
      %p29 = pneg %p28
    $region19: #{tpu_custom_call.1} parent=1 // pred_check_branch
      %31 = sbr.rel (%p29) target = $region21
    $region20: #{tpu_custom_call.1} parent=1 // pred_region
      %vm32 = vcmask 57344
      %33 = vst.msk [vmem:[#allocation2] sm:$0x1] %vm32, 0.0
    $region21: #{tpu_custom_call.1} parent=1 // pred_fallthru
      _
    %v34 = vld [vmem:[#allocation4] sm:$0xff]
    %v35 = vld [vmem:[%s1] sm:$0x1]
    %v36 = vld [vmem:[#allocation2] sm:$0x1]
    %vm37 = vcmask 261120
    %v39 = vsel %vm37, %v35, 0
    %v42 = vsel %vm37, %v34, 0
    %44 = vmatprep.subr.mxu0 0.0
    %45 = vmatpush1.xpose.msra.mxu0 0.0
    %46 = vmatprep.subr.mxu0 0.0
    %47 = vmatpush1.xpose.msra.mxu0 0.0
    %48 = vmatprep.subr.mxu0 0.0
    %49 = vmatpush1.xpose.msra.mxu0 0.0
    %50 = vmatprep.subr.mxu0 0.0
    %51 = vmatpush1.xpose.msra.mxu0 0.0
    %52 = vmatprep.subr.mxu0 0.0
    %53 = vmatpush1.xpose.msra.mxu0 0.0
    %54 = vmatprep.subr.mxu0 0.0
    %55 = vmatpush1.xpose.msra.mxu0 0.0
    %56 = vmatprep.subr.mxu0 0.0
    %57 = vmatpush1.xpose.msra.mxu0 0.0
    %58 = vmatprep.subr.mxu0 0.0
    %59 = vmatpush1.xpose.msra.mxu0 0.0
    %60 = vmatprep.subr.mxu0 0.0
    %61 = vmatpush1.xpose.msra.mxu0 0.0
    %62 = vmatprep.subr.mxu0 0.0
    %63 = vmatpush1.xpose.msra.mxu0 0.0
    %64 = vmatprep.subr.mxu0 0.0
    %65 = vmatpush1.xpose.msra.mxu0 0.0
    %66 = vmatprep.subr.mxu0 0.0
    %67 = vmatpush1.xpose.msra.mxu0 0.0
    %68 = vmatprep.subr.mxu0 0.0
    %69 = vmatpush1.xpose.msra.mxu0 0.0
    %70 = vmatprep.subr.mxu0 0.0
    %71 = vmatpush1.xpose.msra.mxu0 0.0
    %72 = vmatprep.subr.mxu0 0.0
    %73 = vmatpush1.xpose.msra.mxu0 0.0
    %74 = vmatprep.subr.mxu0 0.0
    %v75 = vand.u32 %v42, 4294901760
    %76 = vmatpush1.xpose.msra.mxu0 %v75
    %77 = vmatprep.subr.mxu0 0.0
    %78 = vmatpush2.xpose.msra.mxu0 0.0
    %79 = vmatprep.subr.mxu0 0.0
    %80 = vmatpush2.xpose.msra.mxu0 0.0
    %81 = vmatprep.subr.mxu0 0.0
    %82 = vmatpush2.xpose.msra.mxu0 0.0
    %83 = vmatprep.subr.mxu0 0.0
    %84 = vmatpush2.xpose.msra.mxu0 0.0
    %85 = vmatprep.subr.mxu0 0.0
    %86 = vmatpush2.xpose.msra.mxu0 0.0
    %87 = vmatprep.subr.mxu0 0.0
    %88 = vmatpush2.xpose.msra.mxu0 0.0
    %89 = vmatprep.subr.mxu0 0.0
    %90 = vmatpush2.xpose.msra.mxu0 0.0
    %91 = vmatprep.subr.mxu0 0.0
    %92 = vmatpush2.xpose.msra.mxu0 0.0
    %93 = vmatprep.subr.mxu0 0.0
    %94 = vmatpush2.xpose.msra.mxu0 0.0
    %95 = vmatprep.subr.mxu0 0.0
    %96 = vmatpush2.xpose.msra.mxu0 0.0
    %97 = vmatprep.subr.mxu0 0.0
    %98 = vmatpush2.xpose.msra.mxu0 0.0
    %99 = vmatprep.subr.mxu0 0.0
    %100 = vmatpush2.xpose.msra.mxu0 0.0
    %101 = vmatprep.subr.mxu0 0.0
    %102 = vmatpush2.xpose.msra.mxu0 0.0
    %103 = vmatprep.subr.mxu0 0.0
    %104 = vmatpush2.xpose.msra.mxu0 0.0
    %105 = vmatprep.subr.mxu0 0.0
    %106 = vmatpush2.xpose.msra.mxu0 0.0
    %107 = vmatprep.subr.mxu0 0.0
    %108 = vmatpush2.xpose.msra.mxu0 0.0
    %109 = vmatprep.mubr.f32.mxu0 0.0
    %v110 = vand.u32 %v39, 4294901760
    %v111 = vsub.f32 %v39, %v110
    %v112 = vand.u32 %v111, 4294901760
    %v113 = vsub.f32 %v111, %v112
    %v114 = vand.u32 %v113, 4294901760
    %115 = vmatmul.mubr.f32.gmra.mxu0 %v114
    %v116 = vpop.f32.mrf.mxu0
    %v117 = vadd.f32 0.0, %v116
    %v118 = vpop.f32.mrf.mxu0
    %119 = vdwg.mxu0
    %120 = vmatprep.subr.mxu0 0.0
    %121 = vmatpush1.xpose.msra.mxu0 0.0
    %122 = vmatprep.subr.mxu0 0.0
    %123 = vmatpush1.xpose.msra.mxu0 0.0
    %124 = vmatprep.subr.mxu0 0.0
    %125 = vmatpush1.xpose.msra.mxu0 0.0
    %126 = vmatprep.subr.mxu0 0.0
    %127 = vmatpush1.xpose.msra.mxu0 0.0
    %128 = vmatprep.subr.mxu0 0.0
    %129 = vmatpush1.xpose.msra.mxu0 0.0
    %130 = vmatprep.subr.mxu0 0.0
    %131 = vmatpush1.xpose.msra.mxu0 0.0
    %132 = vmatprep.subr.mxu0 0.0
    %133 = vmatpush1.xpose.msra.mxu0 0.0
    %134 = vmatprep.subr.mxu0 0.0
    %135 = vmatpush1.xpose.msra.mxu0 0.0
    %136 = vmatprep.subr.mxu0 0.0
    %137 = vmatpush1.xpose.msra.mxu0 0.0
    %138 = vmatprep.subr.mxu0 0.0
    %139 = vmatpush1.xpose.msra.mxu0 0.0
    %140 = vmatprep.subr.mxu0 0.0
    %141 = vmatpush1.xpose.msra.mxu0 0.0
    %142 = vmatprep.subr.mxu0 0.0
    %143 = vmatpush1.xpose.msra.mxu0 0.0
    %144 = vmatprep.subr.mxu0 0.0
    %145 = vmatpush1.xpose.msra.mxu0 0.0
    %146 = vmatprep.subr.mxu0 0.0
    %147 = vmatpush1.xpose.msra.mxu0 0.0
    %148 = vmatprep.subr.mxu0 0.0
    %149 = vmatpush1.xpose.msra.mxu0 0.0
    %150 = vmatprep.subr.mxu0 0.0
    %v151 = vand.u32 %v42, 4294901760
    %v152 = vsub.f32 %v42, %v151
    %v153 = vand.u32 %v152, 4294901760
    %v154 = vsub.f32 %v152, %v153
    %v155 = vand.u32 %v154, 4294901760
    %156 = vmatpush1.xpose.msra.mxu0 %v155
    %157 = vmatprep.subr.mxu0 0.0
    %158 = vmatpush2.xpose.msra.mxu0 0.0
    %159 = vmatprep.subr.mxu0 0.0
    %160 = vmatpush2.xpose.msra.mxu0 0.0
    %161 = vmatprep.subr.mxu0 0.0
    %162 = vmatpush2.xpose.msra.mxu0 0.0
    %163 = vmatprep.subr.mxu0 0.0
    %164 = vmatpush2.xpose.msra.mxu0 0.0
    %165 = vmatprep.subr.mxu0 0.0
    %166 = vmatpush2.xpose.msra.mxu0 0.0
    %167 = vmatprep.subr.mxu0 0.0
    %168 = vmatpush2.xpose.msra.mxu0 0.0
    %169 = vmatprep.subr.mxu0 0.0
    %170 = vmatpush2.xpose.msra.mxu0 0.0
    %171 = vmatprep.subr.mxu0 0.0
    %172 = vmatpush2.xpose.msra.mxu0 0.0
    %173 = vmatprep.subr.mxu0 0.0
    %174 = vmatpush2.xpose.msra.mxu0 0.0
    %175 = vmatprep.subr.mxu0 0.0
    %176 = vmatpush2.xpose.msra.mxu0 0.0
    %177 = vmatprep.subr.mxu0 0.0
    %178 = vmatpush2.xpose.msra.mxu0 0.0
    %179 = vmatprep.subr.mxu0 0.0
    %180 = vmatpush2.xpose.msra.mxu0 0.0
    %181 = vmatprep.subr.mxu0 0.0
    %182 = vmatpush2.xpose.msra.mxu0 0.0
    %183 = vmatprep.subr.mxu0 0.0
    %184 = vmatpush2.xpose.msra.mxu0 0.0
    %185 = vmatprep.subr.mxu0 0.0
    %186 = vmatpush2.xpose.msra.mxu0 0.0
    %187 = vmatprep.subr.mxu0 0.0
    %188 = vmatpush2.xpose.msra.mxu0 0.0
    %189 = vmatprep.mubr.f32.mxu0 0.0
    %v190 = vand.u32 %v39, 4294901760
    %191 = vmatmul.mubr.f32.gmra.mxu0 %v190
    %v192 = vpop.f32.mrf.mxu0
    %v193 = vadd.f32 %v117, %v192
    %v194 = vpop.f32.mrf.mxu0
    %195 = vdwg.mxu0
    %196 = vmatprep.subr.mxu0 0.0
    %197 = vmatpush1.xpose.msra.mxu0 0.0
    %198 = vmatprep.subr.mxu0 0.0
    %199 = vmatpush1.xpose.msra.mxu0 0.0
    %200 = vmatprep.subr.mxu0 0.0
    %201 = vmatpush1.xpose.msra.mxu0 0.0
    %202 = vmatprep.subr.mxu0 0.0
    %203 = vmatpush1.xpose.msra.mxu0 0.0
    %204 = vmatprep.subr.mxu0 0.0
    %205 = vmatpush1.xpose.msra.mxu0 0.0
    %206 = vmatprep.subr.mxu0 0.0
    %207 = vmatpush1.xpose.msra.mxu0 0.0
    %208 = vmatprep.subr.mxu0 0.0
    %209 = vmatpush1.xpose.msra.mxu0 0.0
    %210 = vmatprep.subr.mxu0 0.0
    %211 = vmatpush1.xpose.msra.mxu0 0.0
    %212 = vmatprep.subr.mxu0 0.0
    %213 = vmatpush1.xpose.msra.mxu0 0.0
    %214 = vmatprep.subr.mxu0 0.0
    %215 = vmatpush1.xpose.msra.mxu0 0.0
    %216 = vmatprep.subr.mxu0 0.0
    %217 = vmatpush1.xpose.msra.mxu0 0.0
    %218 = vmatprep.subr.mxu0 0.0
    %219 = vmatpush1.xpose.msra.mxu0 0.0
    %220 = vmatprep.subr.mxu0 0.0
    %221 = vmatpush1.xpose.msra.mxu0 0.0
    %222 = vmatprep.subr.mxu0 0.0
    %223 = vmatpush1.xpose.msra.mxu0 0.0
    %224 = vmatprep.subr.mxu0 0.0
    %225 = vmatpush1.xpose.msra.mxu0 0.0
    %226 = vmatprep.subr.mxu0 0.0
    %v227 = vand.u32 %v42, 4294901760
    %v228 = vsub.f32 %v42, %v227
    %229 = vmatpush1.xpose.msra.mxu0 %v228
    %230 = vmatprep.subr.mxu0 0.0
    %231 = vmatpush2.xpose.msra.mxu0 0.0
    %232 = vmatprep.subr.mxu0 0.0
    %233 = vmatpush2.xpose.msra.mxu0 0.0
    %234 = vmatprep.subr.mxu0 0.0
    %235 = vmatpush2.xpose.msra.mxu0 0.0
    %236 = vmatprep.subr.mxu0 0.0
    %237 = vmatpush2.xpose.msra.mxu0 0.0
    %238 = vmatprep.subr.mxu0 0.0
    %239 = vmatpush2.xpose.msra.mxu0 0.0
    %240 = vmatprep.subr.mxu0 0.0
    %241 = vmatpush2.xpose.msra.mxu0 0.0
    %242 = vmatprep.subr.mxu0 0.0
    %243 = vmatpush2.xpose.msra.mxu0 0.0
    %244 = vmatprep.subr.mxu0 0.0
    %245 = vmatpush2.xpose.msra.mxu0 0.0
    %246 = vmatprep.subr.mxu0 0.0
    %247 = vmatpush2.xpose.msra.mxu0 0.0
    %248 = vmatprep.subr.mxu0 0.0
    %249 = vmatpush2.xpose.msra.mxu0 0.0
    %250 = vmatprep.subr.mxu0 0.0
    %251 = vmatpush2.xpose.msra.mxu0 0.0
    %252 = vmatprep.subr.mxu0 0.0
    %253 = vmatpush2.xpose.msra.mxu0 0.0
    %254 = vmatprep.subr.mxu0 0.0
    %255 = vmatpush2.xpose.msra.mxu0 0.0
    %256 = vmatprep.subr.mxu0 0.0
    %257 = vmatpush2.xpose.msra.mxu0 0.0
    %258 = vmatprep.subr.mxu0 0.0
    %259 = vmatpush2.xpose.msra.mxu0 0.0
    %260 = vmatprep.subr.mxu0 0.0
    %261 = vmatpush2.xpose.msra.mxu0 0.0
    %262 = vmatprep.mubr.f32.mxu0 0.0
    %v263 = vand.u32 %v39, 4294901760
    %v264 = vsub.f32 %v39, %v263
    %265 = vmatmul.mubr.f32.gmra.mxu0 %v264
    %v266 = vpop.f32.mrf.mxu0
    %v267 = vadd.f32 %v193, %v266
    %v268 = vpop.f32.mrf.mxu0
    %269 = vdwg.mxu0
    %270 = vmatprep.subr.mxu0 0.0
    %271 = vmatpush1.xpose.msra.mxu0 0.0
    %272 = vmatprep.subr.mxu0 0.0
    %273 = vmatpush1.xpose.msra.mxu0 0.0
    %274 = vmatprep.subr.mxu0 0.0
    %275 = vmatpush1.xpose.msra.mxu0 0.0
    %276 = vmatprep.subr.mxu0 0.0
    %277 = vmatpush1.xpose.msra.mxu0 0.0
    %278 = vmatprep.subr.mxu0 0.0
    %279 = vmatpush1.xpose.msra.mxu0 0.0
    %280 = vmatprep.subr.mxu0 0.0
    %281 = vmatpush1.xpose.msra.mxu0 0.0
    %282 = vmatprep.subr.mxu0 0.0
    %283 = vmatpush1.xpose.msra.mxu0 0.0
    %284 = vmatprep.subr.mxu0 0.0
    %285 = vmatpush1.xpose.msra.mxu0 0.0
    %286 = vmatprep.subr.mxu0 0.0
    %287 = vmatpush1.xpose.msra.mxu0 0.0
    %288 = vmatprep.subr.mxu0 0.0
    %289 = vmatpush1.xpose.msra.mxu0 0.0
    %290 = vmatprep.subr.mxu0 0.0
    %291 = vmatpush1.xpose.msra.mxu0 0.0
    %292 = vmatprep.subr.mxu0 0.0
    %293 = vmatpush1.xpose.msra.mxu0 0.0
    %294 = vmatprep.subr.mxu0 0.0
    %295 = vmatpush1.xpose.msra.mxu0 0.0
    %296 = vmatprep.subr.mxu0 0.0
    %297 = vmatpush1.xpose.msra.mxu0 0.0
    %298 = vmatprep.subr.mxu0 0.0
    %299 = vmatpush1.xpose.msra.mxu0 0.0
    %300 = vmatprep.subr.mxu0 0.0
    %v301 = vand.u32 %v42, 4294901760
    %302 = vmatpush1.xpose.msra.mxu0 %v301
    %303 = vmatprep.subr.mxu0 0.0
    %304 = vmatpush2.xpose.msra.mxu0 0.0
    %305 = vmatprep.subr.mxu0 0.0
    %306 = vmatpush2.xpose.msra.mxu0 0.0
    %307 = vmatprep.subr.mxu0 0.0
    %308 = vmatpush2.xpose.msra.mxu0 0.0
    %309 = vmatprep.subr.mxu0 0.0
    %310 = vmatpush2.xpose.msra.mxu0 0.0
    %311 = vmatprep.subr.mxu0 0.0
    %312 = vmatpush2.xpose.msra.mxu0 0.0
    %313 = vmatprep.subr.mxu0 0.0
    %314 = vmatpush2.xpose.msra.mxu0 0.0
    %315 = vmatprep.subr.mxu0 0.0
    %316 = vmatpush2.xpose.msra.mxu0 0.0
    %317 = vmatprep.subr.mxu0 0.0
    %318 = vmatpush2.xpose.msra.mxu0 0.0
    %319 = vmatprep.subr.mxu0 0.0
    %320 = vmatpush2.xpose.msra.mxu0 0.0
    %321 = vmatprep.subr.mxu0 0.0
    %322 = vmatpush2.xpose.msra.mxu0 0.0
    %323 = vmatprep.subr.mxu0 0.0
    %324 = vmatpush2.xpose.msra.mxu0 0.0
    %325 = vmatprep.subr.mxu0 0.0
    %326 = vmatpush2.xpose.msra.mxu0 0.0
    %327 = vmatprep.subr.mxu0 0.0
    %328 = vmatpush2.xpose.msra.mxu0 0.0
    %329 = vmatprep.subr.mxu0 0.0
    %330 = vmatpush2.xpose.msra.mxu0 0.0
    %331 = vmatprep.subr.mxu0 0.0
    %332 = vmatpush2.xpose.msra.mxu0 0.0
    %333 = vmatprep.subr.mxu0 0.0
    %334 = vmatpush2.xpose.msra.mxu0 0.0
    %335 = vmatprep.mubr.f32.mxu0 0.0
    %v336 = vand.u32 %v39, 4294901760
    %v337 = vsub.f32 %v39, %v336
    %v338 = vand.u32 %v337, 4294901760
    %339 = vmatmul.mubr.f32.gmra.mxu0 %v338
    %v340 = vpop.f32.mrf.mxu0
    %v341 = vadd.f32 %v267, %v340
    %v342 = vpop.f32.mrf.mxu0
    %343 = vdwg.mxu0
    %344 = vmatprep.subr.mxu0 0.0
    %345 = vmatpush1.xpose.msra.mxu0 0.0
    %346 = vmatprep.subr.mxu0 0.0
    %347 = vmatpush1.xpose.msra.mxu0 0.0
    %348 = vmatprep.subr.mxu0 0.0
    %349 = vmatpush1.xpose.msra.mxu0 0.0
    %350 = vmatprep.subr.mxu0 0.0
    %351 = vmatpush1.xpose.msra.mxu0 0.0
    %352 = vmatprep.subr.mxu0 0.0
    %353 = vmatpush1.xpose.msra.mxu0 0.0
    %354 = vmatprep.subr.mxu0 0.0
    %355 = vmatpush1.xpose.msra.mxu0 0.0
    %356 = vmatprep.subr.mxu0 0.0
    %357 = vmatpush1.xpose.msra.mxu0 0.0
    %358 = vmatprep.subr.mxu0 0.0
    %359 = vmatpush1.xpose.msra.mxu0 0.0
    %360 = vmatprep.subr.mxu0 0.0
    %361 = vmatpush1.xpose.msra.mxu0 0.0
    %362 = vmatprep.subr.mxu0 0.0
    %363 = vmatpush1.xpose.msra.mxu0 0.0
    %364 = vmatprep.subr.mxu0 0.0
    %365 = vmatpush1.xpose.msra.mxu0 0.0
    %366 = vmatprep.subr.mxu0 0.0
    %367 = vmatpush1.xpose.msra.mxu0 0.0
    %368 = vmatprep.subr.mxu0 0.0
    %369 = vmatpush1.xpose.msra.mxu0 0.0
    %370 = vmatprep.subr.mxu0 0.0
    %371 = vmatpush1.xpose.msra.mxu0 0.0
    %372 = vmatprep.subr.mxu0 0.0
    %373 = vmatpush1.xpose.msra.mxu0 0.0
    %374 = vmatprep.subr.mxu0 0.0
    %v375 = vand.u32 %v42, 4294901760
    %v376 = vsub.f32 %v42, %v375
    %v377 = vand.u32 %v376, 4294901760
    %378 = vmatpush1.xpose.msra.mxu0 %v377
    %379 = vmatprep.subr.mxu0 0.0
    %380 = vmatpush2.xpose.msra.mxu0 0.0
    %381 = vmatprep.subr.mxu0 0.0
    %382 = vmatpush2.xpose.msra.mxu0 0.0
    %383 = vmatprep.subr.mxu0 0.0
    %384 = vmatpush2.xpose.msra.mxu0 0.0
    %385 = vmatprep.subr.mxu0 0.0
    %386 = vmatpush2.xpose.msra.mxu0 0.0
    %387 = vmatprep.subr.mxu0 0.0
    %388 = vmatpush2.xpose.msra.mxu0 0.0
    %389 = vmatprep.subr.mxu0 0.0
    %390 = vmatpush2.xpose.msra.mxu0 0.0
    %391 = vmatprep.subr.mxu0 0.0
    %392 = vmatpush2.xpose.msra.mxu0 0.0
    %393 = vmatprep.subr.mxu0 0.0
    %394 = vmatpush2.xpose.msra.mxu0 0.0
    %395 = vmatprep.subr.mxu0 0.0
    %396 = vmatpush2.xpose.msra.mxu0 0.0
    %397 = vmatprep.subr.mxu0 0.0
    %398 = vmatpush2.xpose.msra.mxu0 0.0
    %399 = vmatprep.subr.mxu0 0.0
    %400 = vmatpush2.xpose.msra.mxu0 0.0
    %401 = vmatprep.subr.mxu0 0.0
    %402 = vmatpush2.xpose.msra.mxu0 0.0
    %403 = vmatprep.subr.mxu0 0.0
    %404 = vmatpush2.xpose.msra.mxu0 0.0
    %405 = vmatprep.subr.mxu0 0.0
    %406 = vmatpush2.xpose.msra.mxu0 0.0
    %407 = vmatprep.subr.mxu0 0.0
    %408 = vmatpush2.xpose.msra.mxu0 0.0
    %409 = vmatprep.subr.mxu0 0.0
    %410 = vmatpush2.xpose.msra.mxu0 0.0
    %411 = vmatprep.mubr.f32.mxu0 0.0
    %v412 = vand.u32 %v39, 4294901760
    %413 = vmatmul.mubr.f32.gmra.mxu0 %v412
    %v414 = vpop.f32.mrf.mxu0
    %v415 = vadd.f32 %v341, %v414
    %v416 = vpop.f32.mrf.mxu0
    %417 = vdwg.mxu0
    %418 = vmatprep.subr.mxu0 0.0
    %419 = vmatpush1.xpose.msra.mxu0 0.0
    %420 = vmatprep.subr.mxu0 0.0
    %421 = vmatpush1.xpose.msra.mxu0 0.0
    %422 = vmatprep.subr.mxu0 0.0
    %423 = vmatpush1.xpose.msra.mxu0 0.0
    %424 = vmatprep.subr.mxu0 0.0
    %425 = vmatpush1.xpose.msra.mxu0 0.0
    %426 = vmatprep.subr.mxu0 0.0
    %427 = vmatpush1.xpose.msra.mxu0 0.0
    %428 = vmatprep.subr.mxu0 0.0
    %429 = vmatpush1.xpose.msra.mxu0 0.0
    %430 = vmatprep.subr.mxu0 0.0
    %431 = vmatpush1.xpose.msra.mxu0 0.0
    %432 = vmatprep.subr.mxu0 0.0
    %433 = vmatpush1.xpose.msra.mxu0 0.0
    %434 = vmatprep.subr.mxu0 0.0
    %435 = vmatpush1.xpose.msra.mxu0 0.0
    %436 = vmatprep.subr.mxu0 0.0
    %437 = vmatpush1.xpose.msra.mxu0 0.0
    %438 = vmatprep.subr.mxu0 0.0
    %439 = vmatpush1.xpose.msra.mxu0 0.0
    %440 = vmatprep.subr.mxu0 0.0
    %441 = vmatpush1.xpose.msra.mxu0 0.0
    %442 = vmatprep.subr.mxu0 0.0
    %443 = vmatpush1.xpose.msra.mxu0 0.0
    %444 = vmatprep.subr.mxu0 0.0
    %445 = vmatpush1.xpose.msra.mxu0 0.0
    %446 = vmatprep.subr.mxu0 0.0
    %447 = vmatpush1.xpose.msra.mxu0 0.0
    %448 = vmatprep.subr.mxu0 0.0
    %v449 = vand.u32 %v42, 4294901760
    %450 = vmatpush1.xpose.msra.mxu0 %v449
    %451 = vmatprep.subr.mxu0 0.0
    %452 = vmatpush2.xpose.msra.mxu0 0.0
    %453 = vmatprep.subr.mxu0 0.0
    %454 = vmatpush2.xpose.msra.mxu0 0.0
    %455 = vmatprep.subr.mxu0 0.0
    %456 = vmatpush2.xpose.msra.mxu0 0.0
    %457 = vmatprep.subr.mxu0 0.0
    %458 = vmatpush2.xpose.msra.mxu0 0.0
    %459 = vmatprep.subr.mxu0 0.0
    %460 = vmatpush2.xpose.msra.mxu0 0.0
    %461 = vmatprep.subr.mxu0 0.0
    %462 = vmatpush2.xpose.msra.mxu0 0.0
    %463 = vmatprep.subr.mxu0 0.0
    %464 = vmatpush2.xpose.msra.mxu0 0.0
    %465 = vmatprep.subr.mxu0 0.0
    %466 = vmatpush2.xpose.msra.mxu0 0.0
    %467 = vmatprep.subr.mxu0 0.0
    %468 = vmatpush2.xpose.msra.mxu0 0.0
    %469 = vmatprep.subr.mxu0 0.0
    %470 = vmatpush2.xpose.msra.mxu0 0.0
    %471 = vmatprep.subr.mxu0 0.0
    %472 = vmatpush2.xpose.msra.mxu0 0.0
    %473 = vmatprep.subr.mxu0 0.0
    %474 = vmatpush2.xpose.msra.mxu0 0.0
    %475 = vmatprep.subr.mxu0 0.0
    %476 = vmatpush2.xpose.msra.mxu0 0.0
    %477 = vmatprep.subr.mxu0 0.0
    %478 = vmatpush2.xpose.msra.mxu0 0.0
    %479 = vmatprep.subr.mxu0 0.0
    %480 = vmatpush2.xpose.msra.mxu0 0.0
    %481 = vmatprep.subr.mxu0 0.0
    %482 = vmatpush2.xpose.msra.mxu0 0.0
    %483 = vmatprep.mubr.f32.mxu0 0.0
    %v484 = vand.u32 %v39, 4294901760
    %485 = vmatmul.mubr.f32.gmra.mxu0 %v484
    %v486 = vpop.f32.mrf.mxu0
    %v487 = vadd.f32 %v415, %v486
    %v488 = vpop.f32.mrf.mxu0
    %489 = vdwg.mxu0
    %v490 = vadd.f32 %v36, %v487
    %vm491 = vcmask 57344
    %492 = vst.msk [vmem:[#allocation2] sm:$0x1] %vm491, %v490
    // Predicated region
    $region22: #{tpu_custom_call.1} parent=1 // pred_check
      %p493 = pneg %p28
    $region23: #{tpu_custom_call.1} parent=1 // pred_check_branch
      %495 = sbr.rel (%p493) target = $region25
    $region24: #{tpu_custom_call.1} parent=1 // pred_region
      %v496 = vld [vmem:[#allocation2] sm:$0x1]
      %s497 = sld [smem:[#allocation3]]
      %v498 = vstv %s497
      %v499 = vadd.f32 %v496, %v498
      %v500 = vxor.u32 %v499, 2147483648
      %v501 = vmul.f32 %v500, 1.442695
      %v502 = vpow.pop %v501
      %v503 = vadd.f32 %v502, 1.0
      %v504 = vrcp.pop %v503
      %v505 = vmul.f32 1.0, %v504
      %506 = vst.msk [vmem:[#allocation7] sm:$0x1] %vm491, %v505
    $region25: #{tpu_custom_call.1} parent=1 // pred_fallthru
      _
    // Predicated region
    $region26: #{tpu_custom_call.1} parent=1 // pred_check
      _
    $region27: #{tpu_custom_call.1} parent=1 // pred_check_branch
      %508 = sbr.rel (0) target = $region29
    $region28: #{tpu_custom_call.1} parent=1 // pred_region
      %s510 = ssub.s32 16, 16
      %511 = vsyncadd [#allocation6], %s510
      %s513 = sshll.u32 [#allocation7], 4
      %s514 = int_to_ptr.vmem [resolvable:$true] %s513
      %516 = dma.vmem_to_hbm [thread:$0]  %s514, 16, %s3, [#allocation6]
    $region29: #{tpu_custom_call.1} parent=1 // pred_fallthru
      _
    // Predicated region
    $region30: #{tpu_custom_call.1} parent=1 // pred_check
      _
    $region31: #{tpu_custom_call.1} parent=1 // pred_check_branch
      %518 = sbr.rel (0) target = $region33
    $region32: #{tpu_custom_call.1} parent=1 // pred_region
      %519 = dma.done [#allocation6], 16
    $region33: #{tpu_custom_call.1} parent=1 // pred_fallthru
      _
    %520 = vsyncpa [#allocation5], 1
    %521 = vsyncpa [#allocation6], 1

</llo_original>
